<compile_context>
chip_gen: v7x
topology: tpu7x:2x2x1
jax: 0.10.0
libtpu: 0.0.40
codegen_flags: <defaults>
</compile_context>

<pallas_src>
import jax
import jax.numpy as jnp
import numpy as np
from jax.experimental import pallas as pl
from jax.experimental.pallas import tpu as pltpu


def _round_up(v, m):
    return ((v + m - 1) // m) * m


def _make_scatter_kernel(n_atoms, tile_n, tiles_per_split, mask_tail):
    """Kernel: accumulate onehot(batch_tile) @ x_tile into the resident sum."""

    def kernel(batch_ref, x_ref, out_ref):
        i = pl.program_id(1)                       # atom-tile reduction axis

        @pl.when(i == 0)
        def _():
            out_ref[...] = jnp.zeros_like(out_ref)

        b = batch_ref[...]                         # (1, TN) int32
        x_tile = x_ref[...]                        # (TN, Fc), original dtype
        B = out_ref.shape[0]
        TN = x_tile.shape[0]

        if mask_tail:
            # Ragged tail / fully OOB tiles: the VMEM contents beyond N are
            # unspecified (possibly NaN), so zero x itself before the matmul.
            tile_idx = pl.program_id(0) * tiles_per_split + i
            start = tile_idx * tile_n
            row_ids = jax.lax.broadcasted_iota(jnp.int32, (TN, 1), 0)
            valid = (row_ids + start) < n_atoms    # (TN, 1)
            x_tile = jnp.where(valid, x_tile, jnp.zeros_like(x_tile))

        rows = jax.lax.broadcasted_iota(jnp.int32, (B, TN), 0)
        # 0/1 are exact in bf16; keeps the MXU in native bf16 when x is bf16.
        onehot = (rows == b).astype(x_tile.dtype)  # (B, TN)
        out_ref[...] += jnp.dot(onehot, x_tile,
                                preferred_element_type=jnp.float32)

    return kernel


def _tpu_defaults():
    """(physical VMEM bytes per core, default num_splits) — chip aware."""
    vmem_cap = 64 << 20          # conservative fallback (v7x-sized)
    num_splits = 1
    try:
        info = pltpu.get_tpu_info()
        cap = getattr(info, "vmem_capacity_bytes", None)
        if cap:
            vmem_cap = int(cap)
    except Exception:
        pass
    try:
        kind = jax.devices()[0].device_kind.lower()
    except Exception:
        kind = ""
    if "v7" in kind:             # 2 TensorCores per chip -> shard the split axis
        num_splits = 2
    return vmem_cap, num_splits


def _choose_tile_n(n_atoms, f_cols, num_graphs, itemsize, num_splits,
                   vmem_budget_bytes):
    """Largest atom tile whose layout-padded working set fits the budget."""
    lane_f = _round_up(max(f_cols, 1), 128)        # last dim lane-padded to 128
    b_pad = _round_up(max(num_graphs, 1), 8)       # sublane padding of (B, TN)
    # Per atom-row bytes:
    #   x tile: 2 pipeline buffers + 1 masked copy feeding the MXU
    #   batch tile: (1, TN) int32 sublane-padded to 8 rows, double buffered
    #   one-hot (B, TN) in x dtype + row-iota (B, TN) int32
    per_row = (3 * lane_f * itemsize) + (2 * 8 * 4) + b_pad * (itemsize + 4)
    fixed = 4 * b_pad * lane_f * 4                 # resident out block + headroom
    t = (vmem_budget_bytes - fixed) // max(per_row, 1)
    t = max(int(t), 128)
    t = min(t, 32768)                              # sanity cap (keeps DMA per step sane)
    t = (t // 128) * 128
    # Don't pad tiny problems up to a huge tile.
    per_split = -(-n_atoms // max(num_splits, 1))
    t = min(t, _round_up(max(per_split, 1), 128))
    return max(t, 128)


def atomwise_reduce(x, batch, num_graphs, *, reduce="sum",
                    avg_num_atoms=None, tile_n=None, num_splits=None):
    """Pallas equivalent of AtomwiseReduce.forward on the generic field path.

    x:     [N_atoms, F] per-atom features (the `field`)
    batch: [N_atoms] int graph index per atom (AtomicDataDict.BATCH_KEY)
    returns: [num_graphs, F]  (the `out_field`)
    """
    assert reduce in ("sum", "mean", "normalized_sum")
    constant = 1.0
    if reduce == "normalized_sum":
        assert avg_num_atoms is not None
        constant = float(avg_num_atoms) ** (-0.5)
        reduce = "sum"
    do_mean = reduce == "mean"

    N, F = x.shape
    B = int(num_graphs)
    out_dtype = x.dtype
    batch = batch.astype(jnp.int32)

    # Generation-aware VMEM budget / split default.
    vmem_cap, default_splits = _tpu_defaults()
    if num_splits is None:
        num_splits = default_splits
    num_splits = max(1, int(num_splits))
    if vmem_cap >= (128 << 20):        # v5e / v6e
        vmem_limit = 96 << 20
        tile_budget = 64 << 20
    else:                              # v7x (64 MiB / TC) or unknown
        vmem_limit = 44 << 20
        tile_budget = 28 << 20

    itemsize = jnp.dtype(x.dtype).itemsize
    if tile_n is None:
        tile_n = _choose_tile_n(N, F, B, itemsize, num_splits, tile_budget)
    tile_n = int(tile_n)
    assert tile_n % 128 == 0 and tile_n > 0

    total_tiles = -(-N // tile_n)
    num_splits = min(num_splits, total_tiles)
    tiles_per_split = -(-total_tiles // num_splits)
    span = tiles_per_split * num_splits * tile_n
    mask_tail = span != N              # any tile with rows beyond N?
    last_block = total_tiles - 1

    batch2d = batch.reshape(1, N)

    # Clamp block indices so fully out-of-range tiles never DMA out of bounds;
    # their contribution is zeroed by the in-kernel row mask.
    def batch_map(s, i):
        t = s * tiles_per_split + i
        return (0, jnp.minimum(t, last_block))

    def x_map(s, i):
        t = s * tiles_per_split + i
        return (jnp.minimum(t, last_block), 0)

    grid_spec = pltpu.PrefetchScalarGridSpec(
        num_scalar_prefetch=0,
        grid=(num_splits, tiles_per_split),
        in_specs=[
            pl.BlockSpec((1, tile_n), batch_map),
            pl.BlockSpec((tile_n, F), x_map),
        ],
        out_specs=pl.BlockSpec((None, B, F), lambda s, i: (s, 0, 0)),
    )

    partial = pl.pallas_call(
        _make_scatter_kernel(N, tile_n, tiles_per_split, mask_tail),
        out_shape=jax.ShapeDtypeStruct((num_splits, B, F), jnp.float32),
        grid_spec=grid_spec,
        compiler_params=pltpu.CompilerParams(
            dimension_semantics=("parallel", "arbitrary"),
            vmem_limit_bytes=vmem_limit,
        ),
    )(batch2d, x)

    # Tiny (B, F) epilogue in plain JAX: combine splits, mean, constant, cast.
    summed = partial.sum(axis=0) if num_splits > 1 else partial[0]
    if do_mean:
        cnt = jax.ops.segment_sum(jnp.ones((N,), jnp.float32), batch,
                                  num_segments=B)
        summed = summed / jnp.maximum(cnt, 1.0)[:, None]   # empty graphs -> 0
    if constant != 1.0:
        summed = summed * constant
    return summed.astype(out_dtype)


if __name__ == "__main__":
    key = jax.random.PRNGKey(0)
    N_ATOMS = 300      # deliberately NOT a multiple of 128 (exercises tail mask)
    F = 8              # feature width of the reduced field
    B = 3              # number of graphs

    kx, kb = jax.random.split(key)
    x = jax.random.normal(kx, (N_ATOMS, F), dtype=jnp.float32)
    # sorted batch assignment (atoms of a graph contiguous), as produced by
    # AtomicDataDict.with_batch
    batch = jnp.sort(jax.random.randint(kb, (N_ATOMS,), 0, B)).astype(jnp.int32)

    def ref_reduce(xv, mode, avg=None):
        seg = jax.ops.segment_sum(xv, batch, num_segments=B)
        if mode == "mean":
            cnt = jax.ops.segment_sum(jnp.ones((N_ATOMS, 1), jnp.float32),
                                      batch, num_segments=B)
            return seg / jnp.maximum(cnt, 1.0)
        if mode == "normalized_sum":
            return seg * (float(avg) ** -0.5)
        return seg

    ok = True
    for mode, kwargs in (("sum", {}),
                         ("mean", {}),
                         ("normalized_sum", {"avg_num_atoms": 64.0})):
        out = jax.block_until_ready(
            atomwise_reduce(x, batch, B, reduce=mode, **kwargs))
        ref = ref_reduce(x, mode, kwargs.get("avg_num_atoms"))
        ok &= np.allclose(np.asarray(out), np.asarray(ref),
                          rtol=1e-5, atol=1e-5)

    # multi-tile reduction path (grid reduction axis > 1, ragged tail masked)
    out_mt = jax.block_until_ready(
        atomwise_reduce(x, batch, B, reduce="sum", tile_n=128))
    ok &= np.allclose(np.asarray(out_mt), np.asarray(ref_reduce(x, "sum")),
                      rtol=1e-5, atol=1e-5)

    # explicit two-way split (v7x dual-TC path) — still correct on 1-TC chips
    out2 = jax.block_until_ready(
        atomwise_reduce(x, batch, B, reduce="sum", num_splits=2))
    ok &= np.allclose(np.asarray(out2), np.asarray(ref_reduce(x, "sum")),
                      rtol=1e-5, atol=1e-5)

    # bf16 input path (bf16-native MXU, f32 accumulation, bf16 output)
    x_bf16 = x.astype(jnp.bfloat16)
    out_bf = jax.block_until_ready(
        atomwise_reduce(x_bf16, batch, B, reduce="sum"))
    ref_bf = ref_reduce(x_bf16.astype(jnp.float32), "sum")
    ok &= np.allclose(np.asarray(out_bf, dtype=np.float32),
                      np.asarray(ref_bf), rtol=2e-2, atol=2e-2)

    assert ok, "Pallas AtomwiseReduce mismatch vs reference"
    print("KERNEL_OK")
</pallas_src>

<mosaic_0001>
module attributes {stable_mosaic.version = 11 : i64} {
  func.func @kernel(%arg0: i32, %arg1: i32, %arg2: memref<1x384xi32, #tpu.memory_space<vmem>>, %arg3: memref<384x8xf32, #tpu.memory_space<vmem>>, %arg4: memref<1x3x8xf32, #tpu.memory_space<vmem>>) attributes {dimension_semantics = [#tpu.dimension_semantics<parallel>, #tpu.dimension_semantics<arbitrary>], iteration_bounds = array<i64: 1, 1>, scalar_prefetch = 0 : i64, scratch_operands = 0 : i64, tpu.core_type = #tpu.core_type<tc>, window_params = [{transform_indices = @transform_0, window_bounds = array<i64: 1, 384>}, {transform_indices = @transform_1, window_bounds = array<i64: 384, 8>}, {transform_indices = @transform_2, window_bounds = array<i64: 1, 3, 8>}]} {
    %c0_i32 = arith.constant 0 : i32
    %0 = arith.cmpi eq, %arg1, %c0_i32 : i32
    %1 = arith.extui %0 : i1 to i32
    %c0_i32_0 = arith.constant 0 : i32
    %2 = arith.cmpi ne, %1, %c0_i32_0 : i32
    scf.if %2 {
      %cst_11 = arith.constant 0.000000e+00 : f32
      %29 = vector.broadcast %cst_11 : f32 to vector<3x8xf32>
      %c0_12 = arith.constant 0 : index
      %c0_13 = arith.constant 0 : index
      %c0_14 = arith.constant 0 : index
      %30 = vector.load %arg4[%c0_12, %c0_13, %c0_14] : memref<1x3x8xf32, #tpu.memory_space<vmem>>, vector<1x3x8xf32>
      %31 = vector.shape_cast %30 : vector<1x3x8xf32> to vector<3x8xf32>
      %32 = vector.shape_cast %29 : vector<3x8xf32> to vector<1x3x8xf32>
      tpu.vector_store %arg4[%c0_12, %c0_13, %c0_14], %32 {strides = array<i32>} : memref<1x3x8xf32, #tpu.memory_space<vmem>>, vector<1x3x8xf32>,
    } else {
    }
    %c0 = arith.constant 0 : index
    %c0_1 = arith.constant 0 : index
    %3 = vector.load %arg2[%c0, %c0_1] : memref<1x384xi32, #tpu.memory_space<vmem>>, vector<1x384xi32>
    %c0_2 = arith.constant 0 : index
    %c0_3 = arith.constant 0 : index
    %4 = vector.load %arg3[%c0_2, %c0_3] : memref<384x8xf32, #tpu.memory_space<vmem>>, vector<384x8xf32>
    %c1_i32 = arith.constant 1 : i32
    %5 = arith.muli %arg0, %c1_i32 : i32
    %6 = arith.addi %5, %arg1 : i32
    %c384_i32 = arith.constant 384 : i32
    %7 = arith.muli %6, %c384_i32 : i32
    %8 = tpu.iota {dimensions = array<i32: 0>} : vector<384x1xi32>
    %9 = vector.broadcast %7 : i32 to vector<384x1xi32>
    %10 = arith.addi %8, %9 : vector<384x1xi32>
    %c300_i32 = arith.constant 300 : i32
    %11 = vector.broadcast %c300_i32 : i32 to vector<384x1xi32>
    %12 = arith.cmpi slt, %10, %11 : vector<384x1xi32>
    %cst = arith.constant 0.000000e+00 : f32
    %13 = vector.broadcast %cst : f32 to vector<384x8xf32>
    %14 = vector.shape_cast %12 : vector<384x1xi1> to vector<384x1xi1>
    %15 = vector.broadcast %14 : vector<384x1xi1> to vector<384x8xi1>
    %16 = arith.select %15, %4, %13 : vector<384x8xi1>, vector<384x8xf32>
    %17 = tpu.iota {dimensions = array<i32: 0>} : vector<3x384xi32>
    %18 = vector.broadcast %3 : vector<1x384xi32> to vector<3x384xi32>
    %19 = arith.cmpi eq, %17, %18 : vector<3x384xi32>
    %20 = arith.extui %19 : vector<3x384xi1> to vector<3x384xi32>
    %21 = arith.sitofp %20 : vector<3x384xi32> to vector<3x384xf32>
    %c0_4 = arith.constant 0 : index
    %c0_5 = arith.constant 0 : index
    %c0_6 = arith.constant 0 : index
    %22 = vector.load %arg4[%c0_4, %c0_5, %c0_6] : memref<1x3x8xf32, #tpu.memory_space<vmem>>, vector<1x3x8xf32>
    %23 = vector.shape_cast %22 : vector<1x3x8xf32> to vector<3x8xf32>
    %cst_7 = arith.constant dense<0.000000e+00> : vector<3x8xf32>
    %24 = tpu.matmul %21, %16, %cst_7 {dimension_numbers = #tpu.dot_dimension_numbers<[1], [0], [0], [1], [0, 0, 1, 1], [], []>} : vector<3x384xf32>, vector<384x8xf32>, vector<3x8xf32> -> vector<3x8xf32>
    %25 = arith.addf %23, %24 : vector<3x8xf32>
    %c0_8 = arith.constant 0 : index
    %c0_9 = arith.constant 0 : index
    %c0_10 = arith.constant 0 : index
    %26 = vector.load %arg4[%c0_8, %c0_9, %c0_10] : memref<1x3x8xf32, #tpu.memory_space<vmem>>, vector<1x3x8xf32>
    %27 = vector.shape_cast %26 : vector<1x3x8xf32> to vector<3x8xf32>
    %28 = vector.shape_cast %25 : vector<3x8xf32> to vector<1x3x8xf32>
    tpu.vector_store %arg4[%c0_8, %c0_9, %c0_10], %28 {strides = array<i32>} : memref<1x3x8xf32, #tpu.memory_space<vmem>>, vector<1x3x8xf32>,
    return
  }
  func.func @transform_0(%arg0: i32, %arg1: i32) -> (i32, i32) {
    %c1_i32 = arith.constant 1 : i32
    %0 = arith.muli %arg0, %c1_i32 : i32
    %1 = arith.addi %0, %arg1 : i32
    %c0_i32 = arith.constant 0 : i32
    %2 = arith.minsi %1, %c0_i32 : i32
    %c0_i32_0 = arith.constant 0 : i32
    %c0_i32_1 = arith.constant 0 : i32
    return %c0_i32_0, %2 : i32, i32
  }
  func.func @transform_1(%arg0: i32, %arg1: i32) -> (i32, i32) {
    %c1_i32 = arith.constant 1 : i32
    %0 = arith.muli %arg0, %c1_i32 : i32
    %1 = arith.addi %0, %arg1 : i32
    %c0_i32 = arith.constant 0 : i32
    %2 = arith.minsi %1, %c0_i32 : i32
    %c0_i32_0 = arith.constant 0 : i32
    %c0_i32_1 = arith.constant 0 : i32
    return %2, %c0_i32_0 : i32, i32
  }
  func.func @transform_2(%arg0: i32, %arg1: i32) -> (i32, i32, i32) {
    %c0_i32 = arith.constant 0 : i32
    %c0_i32_0 = arith.constant 0 : i32
    %c0_i32_1 = arith.constant 0 : i32
    return %arg0, %c0_i32, %c0_i32_0 : i32, i32, i32
  }
}

</mosaic_0001>

<llo_original>
// kernel: tpu_custom_call.1
$region0: #{tpu_custom_call.1}
  #allocation0 [shape = 'u32[]', space=smem, size = 0x4, offset = 0x4, fixed_abs, tag = 'smem constant byte address 0x4 - core index']
  #allocation1 [shape = 'u32[144,128]{1,0:T(1,128)}', space=vmem, size = 0x12000, scoped, tag = 'internal scratch']
  %s0 = inlined_call_operand.vmem [shape: s32[1,300], index: 0, kind: input, shape index: {}]
  %s1 = inlined_call_operand.vmem [shape: f32[300,8], index: 1, kind: input, shape index: {}]
  %s2 = inlined_call_operand.vmem [shape: f32[1,3,8], index: 2, kind: output, shape index: {}]
  %s3 = sld [smem:[#allocation0]]
  $region22: #{tpu_custom_call.1} parent=0
    _
  %s5 = ssub.s32 1, %s3
  %s6 = scalar_select 0, %s5, %s3
  // Predicated region
  $region2: #{tpu_custom_call.1} parent=0 // pred_check
    _
  $region3: #{tpu_custom_call.1} parent=0 // pred_check_branch
    %8 = sbr.rel (0) target = $region5
  $region4: #{tpu_custom_call.1} parent=0 // pred_region
    %s9 = sadd.s32 0, 0
    %p10 = scmp.lt.s32.totalorder %s9, 0
    %s11 = scalar_select %p10, %s9, 0
    %s12 = smul.u32 3, %s11
    %p13 = scmp.lt.s32.totalorder %s12, 2
    %s14 = scalar_select %p13, %s12, 2
    %s15 = scalar_lea.vmem %s0, %s14
    %s16 = sadd.s32 0, 0
    %p17 = scmp.lt.s32.totalorder %s16, 0
    %s18 = scalar_select %p17, %s16, 0
    %s19 = smul.u32 3, %s18
  $region5: #{tpu_custom_call.1} parent=0 // pred_fallthru
    _
  // Predicated region
  $region6: #{tpu_custom_call.1} parent=0 // pred_check
    _
  $region7: #{tpu_custom_call.1} parent=0 // pred_check_branch
    %21 = sbr.rel (0) target = $region9
  $region8: #{tpu_custom_call.1} parent=0 // pred_region
    %s22 = sadd.s32 0, 0
    %p23 = scmp.lt.s32.totalorder %s22, 0
    %s24 = scalar_select %p23, %s22, 0
    %s25 = smul.u32 48, %s24
    %s26 = ssub.s32 38, %s25
    %s27 = smul.u32 128, %s26
    %p28 = scmp.lt.s32.totalorder %s25, 37
    %s29 = scalar_select %p28, %s25, 37
    %s30 = smul.addr %s29, 8
    %s31 = scalar_lea.vmem %s1, %s30
    %s32 = sadd.s32 0, 0
    %p33 = scmp.lt.s32.totalorder %s32, 0
    %s34 = scalar_select %p33, %s32, 0
    %s35 = smul.u32 48, %s34
    %s36 = ssub.s32 38, %s35
    %s37 = smul.u32 128, %s36
  $region9: #{tpu_custom_call.1} parent=0 // pred_fallthru
    _
  %s38 = sadd.s32 0, 0
  %p39 = scmp.lt.s32.totalorder %s38, 0
  %s40 = scalar_select %p39, %s38, 0
  %s41 = smul.u32 3, %s40
  %p42 = scmp.lt.s32.totalorder %s41, 2
  %s43 = scalar_select %p42, %s41, 2
  %s44 = scalar_lea.vmem %s0, %s43
  %s45 = sadd.s32 0, 0
  %p46 = scmp.lt.s32.totalorder %s45, 0
  %s47 = scalar_select %p46, %s45, 0
  %s48 = smul.u32 48, %s47
  %s49 = ssub.s32 38, %s48
  %s50 = smul.u32 128, %s49
  %p51 = scmp.lt.s32.totalorder %s48, 37
  %s52 = scalar_select %p51, %s48, 37
  %s53 = smul.addr %s52, 8
  %s54 = scalar_lea.vmem %s1, %s53
  %s55 = sadd.s32 0, 0
  %p56 = scmp.lt.s32.totalorder %s55, 0
  %s57 = scalar_select %p56, %s55, 0
  %s58 = smul.u32 3, %s57
  %p59 = scmp.lt.s32.totalorder %s58, 2
  %s60 = scalar_select %p59, %s58, 2
  %s61 = scalar_lea.vmem %s0, %s60
  %s62 = sadd.s32 0, 0
  %p63 = scmp.lt.s32.totalorder %s62, 0
  %s64 = scalar_select %p63, %s62, 0
  %s65 = smul.u32 3, %s64
  %s66 = sadd.s32 0, 0
  %p67 = scmp.lt.s32.totalorder %s66, 0
  %s68 = scalar_select %p67, %s66, 0
  %s69 = smul.u32 48, %s68
  %s70 = ssub.s32 38, %s69
  %s71 = smul.u32 128, %s70
  %p72 = scmp.lt.s32.totalorder %s69, 37
  %s73 = scalar_select %p72, %s69, 37
  %s74 = smul.addr %s73, 8
  %s75 = scalar_lea.vmem %s1, %s74
  %s76 = sadd.s32 0, 0
  %p77 = scmp.lt.s32.totalorder %s76, 0
  %s78 = scalar_select %p77, %s76, 0
  %s79 = smul.u32 48, %s78
  %s80 = ssub.s32 38, %s79
  %s81 = smul.u32 128, %s80
  %p82 = scmp.eq.s32.totalorder 0, 0
  // Predicated region
  $region10: #{tpu_custom_call.1} parent=0 // pred_check
    %p83 = pneg %p82
  $region11: #{tpu_custom_call.1} parent=0 // pred_check_branch
    %85 = sbr.rel (%p83) target = $region13
  $region12: #{tpu_custom_call.1} parent=0 // pred_region
    %vm86 = vcmask 59392
    %87 = vst.msk [vmem:[%s2] sm:$0x7] %vm86, 0.0
  $region13: #{tpu_custom_call.1} parent=0 // pred_fallthru
    _
  %v88 = vld [vmem:[%s61] sm:$0x7]
  %v89 = vld [vmem:[%s75] sm:$0xff]
  %v90 = vld [vmem:[%s75 + $0x8] sm:$0xff]
  %v91 = vld [vmem:[%s75 + $0x10] sm:$0xff]
  %v92 = vld [vmem:[%s75 + $0x18] sm:$0xff]
  %v93 = vld [vmem:[%s75 + $0x20] sm:$0xff]
  %v94 = vld [vmem:[%s75 + $0x28] sm:$0xff]
  %v95 = vld [vmem:[%s75 + $0x30] sm:$0xff]
  %v96 = vld [vmem:[%s75 + $0x38] sm:$0xff]
  %v97 = vld [vmem:[%s75 + $0x40] sm:$0xff]
  %v98 = vld [vmem:[%s75 + $0x48] sm:$0xff]
  %v99 = vld [vmem:[%s75 + $0x50] sm:$0xff]
  %v100 = vld [vmem:[%s75 + $0x58] sm:$0xff]
  %v101 = vld [vmem:[%s75 + $0x60] sm:$0xff]
  %v102 = vld [vmem:[%s75 + $0x68] sm:$0xff]
  %v103 = vld [vmem:[%s75 + $0x70] sm:$0xff]
  %v104 = vld [vmem:[%s75 + $0x78] sm:$0xff]
  %v105 = vld [vmem:[%s75 + $0x80] sm:$0xff]
  %v106 = vld [vmem:[%s75 + $0x88] sm:$0xff]
  %v107 = vld [vmem:[%s75 + $0x90] sm:$0xff]
  %v108 = vld [vmem:[%s75 + $0x98] sm:$0xff]
  %v109 = vld [vmem:[%s75 + $0xa0] sm:$0xff]
  %v110 = vld [vmem:[%s75 + $0xa8] sm:$0xff]
  %v111 = vld [vmem:[%s75 + $0xb0] sm:$0xff]
  %v112 = vld [vmem:[%s75 + $0xb8] sm:$0xff]
  %v113 = vld [vmem:[%s75 + $0xc0] sm:$0xff]
  %v114 = vld [vmem:[%s75 + $0xc8] sm:$0xff]
  %v115 = vld [vmem:[%s75 + $0xd0] sm:$0xff]
  %v116 = vld [vmem:[%s75 + $0xd8] sm:$0xff]
  %v117 = vld [vmem:[%s75 + $0xe0] sm:$0xff]
  %v118 = vld [vmem:[%s75 + $0xe8] sm:$0xff]
  %v119 = vld [vmem:[%s75 + $0xf0] sm:$0xff]
  %v120 = vld [vmem:[%s75 + $0xf8] sm:$0xff]
  %v121 = vld [vmem:[%s75 + $0x100] sm:$0xff]
  %v122 = vld [vmem:[%s75 + $0x108] sm:$0xff]
  %v123 = vld [vmem:[%s75 + $0x110] sm:$0xff]
  %v124 = vld [vmem:[%s75 + $0x118] sm:$0xff]
  %v125 = vld [vmem:[%s75 + $0x120] sm:$0xff]
  %v126 = vld [vmem:[%s75 + $0x128] sm:$0xff]
  %v127 = vld [vmem:[%s75 + $0x130] sm:$0xff]
  %v128 = vld [vmem:[%s75 + $0x138] sm:$0xff]
  %v129 = vld [vmem:[%s75 + $0x140] sm:$0xff]
  %v130 = vld [vmem:[%s75 + $0x148] sm:$0xff]
  %v131 = vld [vmem:[%s75 + $0x150] sm:$0xff]
  %v132 = vld [vmem:[%s75 + $0x158] sm:$0xff]
  %v133 = vld [vmem:[%s75 + $0x160] sm:$0xff]
  %v134 = vld [vmem:[%s75 + $0x168] sm:$0xff]
  %v135 = vld [vmem:[%s75 + $0x170] sm:$0xff]
  %v136 = vld [vmem:[%s75 + $0x178] sm:$0xff]
  %s137 = sadd.s32 0, 0
  %s138 = smul.u32 %s137, 384
  %v139 = vlaneseq
  %v140 = vshrl.u32 %v139, 7
  %v141 = vadd.s32 %v140, 8
  %v142 = vadd.s32 %v140, 16
  %v143 = vadd.s32 %v140, 24
  %v144 = vadd.s32 %v140, 32
  %v145 = vadd.s32 %v140, 40
  %v146 = vadd.s32 %v140, 48
  %v147 = vadd.s32 %v140, 56
  %v148 = vadd.s32 %v140, 64
  %v149 = vadd.s32 %v140, 72
  %v150 = vadd.s32 %v140, 80
  %v151 = vadd.s32 %v140, 88
  %v152 = vadd.s32 %v140, 96
  %v153 = vadd.s32 %v140, 104
  %v154 = vadd.s32 %v140, 112
  %v155 = vadd.s32 %v140, 120
  %v156 = vadd.s32 %v140, 128
  %v157 = vadd.s32 %v140, 136
  %v158 = vadd.s32 %v140, 144
  %v159 = vadd.s32 %v140, 152
  %v160 = vadd.s32 %v140, 160
  %v161 = vadd.s32 %v140, 168
  %v162 = vadd.s32 %v140, 176
  %v163 = vadd.s32 %v140, 184
  %v164 = vadd.s32 %v140, 192
  %v165 = vadd.s32 %v140, 200
  %v166 = vadd.s32 %v140, 208
  %v167 = vadd.s32 %v140, 216
  %v168 = vadd.s32 %v140, 224
  %v169 = vadd.s32 %v140, 232
  %v170 = vadd.s32 %v140, 240
  %v171 = vadd.s32 %v140, 248
  %v172 = vadd.s32 %v140, 256
  %v173 = vadd.s32 %v140, 264
  %v174 = vadd.s32 %v140, 272
  %v175 = vadd.s32 %v140, 280
  %v176 = vadd.s32 %v140, 288
  %v177 = vadd.s32 %v140, 296
  %v178 = vadd.s32 %v140, 304
  %v179 = vadd.s32 %v140, 312
  %v180 = vadd.s32 %v140, 320
  %v181 = vadd.s32 %v140, 328
  %v182 = vadd.s32 %v140, 336
  %v183 = vadd.s32 %v140, 344
  %v184 = vadd.s32 %v140, 352
  %v185 = vadd.s32 %v140, 360
  %v186 = vadd.s32 %v140, 368
  %v187 = vadd.s32 %v140, 376
  %v188 = vstv %s138
  %v189 = vadd.s32 %v140, %v188
  %v190 = vadd.s32 %v141, %v188
  %v191 = vadd.s32 %v142, %v188
  %v192 = vadd.s32 %v143, %v188
  %v193 = vadd.s32 %v144, %v188
  %v194 = vadd.s32 %v145, %v188
  %v195 = vadd.s32 %v146, %v188
  %v196 = vadd.s32 %v147, %v188
  %v197 = vadd.s32 %v148, %v188
  %v198 = vadd.s32 %v149, %v188
  %v199 = vadd.s32 %v150, %v188
  %v200 = vadd.s32 %v151, %v188
  %v201 = vadd.s32 %v152, %v188
  %v202 = vadd.s32 %v153, %v188
  %v203 = vadd.s32 %v154, %v188
  %v204 = vadd.s32 %v155, %v188
  %v205 = vadd.s32 %v156, %v188
  %v206 = vadd.s32 %v157, %v188
  %v207 = vadd.s32 %v158, %v188
  %v208 = vadd.s32 %v159, %v188
  %v209 = vadd.s32 %v160, %v188
  %v210 = vadd.s32 %v161, %v188
  %v211 = vadd.s32 %v162, %v188
  %v212 = vadd.s32 %v163, %v188
  %v213 = vadd.s32 %v164, %v188
  %v214 = vadd.s32 %v165, %v188
  %v215 = vadd.s32 %v166, %v188
  %v216 = vadd.s32 %v167, %v188
  %v217 = vadd.s32 %v168, %v188
  %v218 = vadd.s32 %v169, %v188
  %v219 = vadd.s32 %v170, %v188
  %v220 = vadd.s32 %v171, %v188
  %v221 = vadd.s32 %v172, %v188
  %v222 = vadd.s32 %v173, %v188
  %v223 = vadd.s32 %v174, %v188
  %v224 = vadd.s32 %v175, %v188
  %v225 = vadd.s32 %v176, %v188
  %v226 = vadd.s32 %v177, %v188
  %v227 = vadd.s32 %v178, %v188
  %v228 = vadd.s32 %v179, %v188
  %v229 = vadd.s32 %v180, %v188
  %v230 = vadd.s32 %v181, %v188
  %v231 = vadd.s32 %v182, %v188
  %v232 = vadd.s32 %v183, %v188
  %v233 = vadd.s32 %v184, %v188
  %v234 = vadd.s32 %v185, %v188
  %v235 = vadd.s32 %v186, %v188
  %v236 = vadd.s32 %v187, %v188
  %vm237 = vcmp.lt.s32.totalorder %v189, 300
  %vm238 = vcmp.lt.s32.totalorder %v190, 300
  %vm239 = vcmp.lt.s32.totalorder %v191, 300
  %vm240 = vcmp.lt.s32.totalorder %v192, 300
  %vm241 = vcmp.lt.s32.totalorder %v193, 300
  %vm242 = vcmp.lt.s32.totalorder %v194, 300
  %vm243 = vcmp.lt.s32.totalorder %v195, 300
  %vm244 = vcmp.lt.s32.totalorder %v196, 300
  %vm245 = vcmp.lt.s32.totalorder %v197, 300
  %vm246 = vcmp.lt.s32.totalorder %v198, 300
  %vm247 = vcmp.lt.s32.totalorder %v199, 300
  %vm248 = vcmp.lt.s32.totalorder %v200, 300
  %vm249 = vcmp.lt.s32.totalorder %v201, 300
  %vm250 = vcmp.lt.s32.totalorder %v202, 300
  %vm251 = vcmp.lt.s32.totalorder %v203, 300
  %vm252 = vcmp.lt.s32.totalorder %v204, 300
  %vm253 = vcmp.lt.s32.totalorder %v205, 300
  %vm254 = vcmp.lt.s32.totalorder %v206, 300
  %vm255 = vcmp.lt.s32.totalorder %v207, 300
  %vm256 = vcmp.lt.s32.totalorder %v208, 300
  %vm257 = vcmp.lt.s32.totalorder %v209, 300
  %vm258 = vcmp.lt.s32.totalorder %v210, 300
  %vm259 = vcmp.lt.s32.totalorder %v211, 300
  %vm260 = vcmp.lt.s32.totalorder %v212, 300
  %vm261 = vcmp.lt.s32.totalorder %v213, 300
  %vm262 = vcmp.lt.s32.totalorder %v214, 300
  %vm263 = vcmp.lt.s32.totalorder %v215, 300
  %vm264 = vcmp.lt.s32.totalorder %v216, 300
  %vm265 = vcmp.lt.s32.totalorder %v217, 300
  %vm266 = vcmp.lt.s32.totalorder %v218, 300
  %vm267 = vcmp.lt.s32.totalorder %v219, 300
  %vm268 = vcmp.lt.s32.totalorder %v220, 300
  %vm269 = vcmp.lt.s32.totalorder %v221, 300
  %vm270 = vcmp.lt.s32.totalorder %v222, 300
  %vm271 = vcmp.lt.s32.totalorder %v223, 300
  %vm272 = vcmp.lt.s32.totalorder %v224, 300
  %vm273 = vcmp.lt.s32.totalorder %v225, 300
  %vm274 = vcmp.lt.s32.totalorder %v226, 300
  %vm275 = vcmp.lt.s32.totalorder %v227, 300
  %vm276 = vcmp.lt.s32.totalorder %v228, 300
  %vm277 = vcmp.lt.s32.totalorder %v229, 300
  %vm278 = vcmp.lt.s32.totalorder %v230, 300
  %vm279 = vcmp.lt.s32.totalorder %v231, 300
  %vm280 = vcmp.lt.s32.totalorder %v232, 300
  %vm281 = vcmp.lt.s32.totalorder %v233, 300
  %vm282 = vcmp.lt.s32.totalorder %v234, 300
  %vm283 = vcmp.lt.s32.totalorder %v235, 300
  %vm284 = vcmp.lt.s32.totalorder %v236, 300
  %v285 = vsel %vm237, 1, 0
  %v286 = vsel %vm238, 1, 0
  %v287 = vsel %vm239, 1, 0
  %v288 = vsel %vm240, 1, 0
  %v289 = vsel %vm241, 1, 0
  %v290 = vsel %vm242, 1, 0
  %v291 = vsel %vm243, 1, 0
  %v292 = vsel %vm244, 1, 0
  %v293 = vsel %vm245, 1, 0
  %v294 = vsel %vm246, 1, 0
  %v295 = vsel %vm247, 1, 0
  %v296 = vsel %vm248, 1, 0
  %v297 = vsel %vm249, 1, 0
  %v298 = vsel %vm250, 1, 0
  %v299 = vsel %vm251, 1, 0
  %v300 = vsel %vm252, 1, 0
  %v301 = vsel %vm253, 1, 0
  %v302 = vsel %vm254, 1, 0
  %v303 = vsel %vm255, 1, 0
  %v304 = vsel %vm256, 1, 0
  %v305 = vsel %vm257, 1, 0
  %v306 = vsel %vm258, 1, 0
  %v307 = vsel %vm259, 1, 0
  %v308 = vsel %vm260, 1, 0
  %v309 = vsel %vm261, 1, 0
  %v310 = vsel %vm262, 1, 0
  %v311 = vsel %vm263, 1, 0
  %v312 = vsel %vm264, 1, 0
  %v313 = vsel %vm265, 1, 0
  %v314 = vsel %vm266, 1, 0
  %v315 = vsel %vm267, 1, 0
  %v316 = vsel %vm268, 1, 0
  %v317 = vsel %vm269, 1, 0
  %v318 = vsel %vm270, 1, 0
  %v319 = vsel %vm271, 1, 0
  %v320 = vsel %vm272, 1, 0
  %v321 = vsel %vm273, 1, 0
  %v322 = vsel %vm274, 1, 0
  %v323 = vsel %vm275, 1, 0
  %v324 = vsel %vm276, 1, 0
  %v325 = vsel %vm277, 1, 0
  %v326 = vsel %vm278, 1, 0
  %v327 = vsel %vm279, 1, 0
  %v328 = vsel %vm280, 1, 0
  %v329 = vsel %vm281, 1, 0
  %v330 = vsel %vm282, 1, 0
  %v331 = vsel %vm283, 1, 0
  %v332 = vsel %vm284, 1, 0
  %vm333 = vcmp.eq.s32.totalorder %v285, 1
  %vm334 = vcmp.eq.s32.totalorder %v286, 1
  %vm335 = vcmp.eq.s32.totalorder %v287, 1
  %vm336 = vcmp.eq.s32.totalorder %v288, 1
  %vm337 = vcmp.eq.s32.totalorder %v289, 1
  %vm338 = vcmp.eq.s32.totalorder %v290, 1
  %vm339 = vcmp.eq.s32.totalorder %v291, 1
  %vm340 = vcmp.eq.s32.totalorder %v292, 1
  %vm341 = vcmp.eq.s32.totalorder %v293, 1
  %vm342 = vcmp.eq.s32.totalorder %v294, 1
  %vm343 = vcmp.eq.s32.totalorder %v295, 1
  %vm344 = vcmp.eq.s32.totalorder %v296, 1
  %vm345 = vcmp.eq.s32.totalorder %v297, 1
  %vm346 = vcmp.eq.s32.totalorder %v298, 1
  %vm347 = vcmp.eq.s32.totalorder %v299, 1
  %vm348 = vcmp.eq.s32.totalorder %v300, 1
  %vm349 = vcmp.eq.s32.totalorder %v301, 1
  %vm350 = vcmp.eq.s32.totalorder %v302, 1
  %vm351 = vcmp.eq.s32.totalorder %v303, 1
  %vm352 = vcmp.eq.s32.totalorder %v304, 1
  %vm353 = vcmp.eq.s32.totalorder %v305, 1
  %vm354 = vcmp.eq.s32.totalorder %v306, 1
  %vm355 = vcmp.eq.s32.totalorder %v307, 1
  %vm356 = vcmp.eq.s32.totalorder %v308, 1
  %vm357 = vcmp.eq.s32.totalorder %v309, 1
  %vm358 = vcmp.eq.s32.totalorder %v310, 1
  %vm359 = vcmp.eq.s32.totalorder %v311, 1
  %vm360 = vcmp.eq.s32.totalorder %v312, 1
  %vm361 = vcmp.eq.s32.totalorder %v313, 1
  %vm362 = vcmp.eq.s32.totalorder %v314, 1
  %vm363 = vcmp.eq.s32.totalorder %v315, 1
  %vm364 = vcmp.eq.s32.totalorder %v316, 1
  %vm365 = vcmp.eq.s32.totalorder %v317, 1
  %vm366 = vcmp.eq.s32.totalorder %v318, 1
  %vm367 = vcmp.eq.s32.totalorder %v319, 1
  %vm368 = vcmp.eq.s32.totalorder %v320, 1
  %vm369 = vcmp.eq.s32.totalorder %v321, 1
  %vm370 = vcmp.eq.s32.totalorder %v322, 1
  %vm371 = vcmp.eq.s32.totalorder %v323, 1
  %vm372 = vcmp.eq.s32.totalorder %v324, 1
  %vm373 = vcmp.eq.s32.totalorder %v325, 1
  %vm374 = vcmp.eq.s32.totalorder %v326, 1
  %vm375 = vcmp.eq.s32.totalorder %v327, 1
  %vm376 = vcmp.eq.s32.totalorder %v328, 1
  %vm377 = vcmp.eq.s32.totalorder %v329, 1
  %vm378 = vcmp.eq.s32.totalorder %v330, 1
  %vm379 = vcmp.eq.s32.totalorder %v331, 1
  %vm380 = vcmp.eq.s32.totalorder %v332, 1
  %v381 = vsel %vm333, %v89, 0.0
  %v382 = vsel %vm334, %v90, 0.0
  %v383 = vsel %vm335, %v91, 0.0
  %v384 = vsel %vm336, %v92, 0.0
  %v385 = vsel %vm337, %v93, 0.0
  %v386 = vsel %vm338, %v94, 0.0
  %v387 = vsel %vm339, %v95, 0.0
  %v388 = vsel %vm340, %v96, 0.0
  %v389 = vsel %vm341, %v97, 0.0
  %v390 = vsel %vm342, %v98, 0.0
  %v391 = vsel %vm343, %v99, 0.0
  %v392 = vsel %vm344, %v100, 0.0
  %v393 = vsel %vm345, %v101, 0.0
  %v394 = vsel %vm346, %v102, 0.0
  %v395 = vsel %vm347, %v103, 0.0
  %v396 = vsel %vm348, %v104, 0.0
  %v397 = vsel %vm349, %v105, 0.0
  %v398 = vsel %vm350, %v106, 0.0
  %v399 = vsel %vm351, %v107, 0.0
  %v400 = vsel %vm352, %v108, 0.0
  %v401 = vsel %vm353, %v109, 0.0
  %v402 = vsel %vm354, %v110, 0.0
  %v403 = vsel %vm355, %v111, 0.0
  %v404 = vsel %vm356, %v112, 0.0
  %v405 = vsel %vm357, %v113, 0.0
  %v406 = vsel %vm358, %v114, 0.0
  %v407 = vsel %vm359, %v115, 0.0
  %v408 = vsel %vm360, %v116, 0.0
  %v409 = vsel %vm361, %v117, 0.0
  %v410 = vsel %vm362, %v118, 0.0
  %v411 = vsel %vm363, %v119, 0.0
  %v412 = vsel %vm364, %v120, 0.0
  %v413 = vsel %vm365, %v121, 0.0
  %v414 = vsel %vm366, %v122, 0.0
  %v415 = vsel %vm367, %v123, 0.0
  %v416 = vsel %vm368, %v124, 0.0
  %v417 = vsel %vm369, %v125, 0.0
  %v418 = vsel %vm370, %v126, 0.0
  %v419 = vsel %vm371, %v127, 0.0
  %v420 = vsel %vm372, %v128, 0.0
  %v421 = vsel %vm373, %v129, 0.0
  %v422 = vsel %vm374, %v130, 0.0
  %v423 = vsel %vm375, %v131, 0.0
  %v424 = vsel %vm376, %v132, 0.0
  %v425 = vsel %vm377, %v133, 0.0
  %v426 = vsel %vm378, %v134, 0.0
  %v427 = vsel %vm379, %v135, 0.0
  %v428 = vsel %vm380, %v136, 0.0
  %v429 = vlaneseq
  %v430 = vshrl.u32 %v429, 7
  %v431 = vsub.s32 0, %v430
  %v432 = vrot.slane %v88, %v431
  %v433 = vlaneseq
  %v434 = vshrl.u32 %v433, 7
  %v435 = vsub.s32 1, %v434
  %v436 = vrot.slane %v88, %v435
  %v437 = vlaneseq
  %v438 = vshrl.u32 %v437, 7
  %v439 = vsub.s32 2, %v438
  %v440 = vrot.slane %v88, %v439
  %vm441 = vcmp.eq.s32.totalorder %v140, %v432
  %vm442 = vcmp.eq.s32.totalorder %v140, %v436
  %vm443 = vcmp.eq.s32.totalorder %v140, %v440
  %v444 = vsel %vm441, 1, 0
  %v445 = vsel %vm442, 1, 0
  %v446 = vsel %vm443, 1, 0
  %v447 = vcvt.s32.f32 %v444
  %v448 = vcvt.s32.f32 %v445
  %v449 = vcvt.s32.f32 %v446
  %v450 = vld [vmem:[%s2] sm:$0x7]
  %451 = vmatprep.subr.mxu0 0.0
  %452 = vmatpush1.msra.mxu0 %v381
  %453 = vmatprep.subr.mxu0 0.0
  %454 = vmatpush1.msra.mxu0 %v382
  %455 = vmatprep.subr.mxu0 0.0
  %456 = vmatpush1.msra.mxu0 %v383
  %457 = vmatprep.subr.mxu0 0.0
  %458 = vmatpush1.msra.mxu0 %v384
  %459 = vmatprep.subr.mxu0 0.0
  %460 = vmatpush1.msra.mxu0 %v385
  %461 = vmatprep.subr.mxu0 0.0
  %462 = vmatpush1.msra.mxu0 %v386
  %463 = vmatprep.subr.mxu0 0.0
  %464 = vmatpush1.msra.mxu0 %v387
  %465 = vmatprep.subr.mxu0 0.0
  %466 = vmatpush1.msra.mxu0 %v388
  %467 = vmatprep.subr.mxu0 0.0
  %468 = vmatpush1.msra.mxu0 %v389
  %469 = vmatprep.subr.mxu0 0.0
  %470 = vmatpush1.msra.mxu0 %v390
  %471 = vmatprep.subr.mxu0 0.0
  %472 = vmatpush1.msra.mxu0 %v391
  %473 = vmatprep.subr.mxu0 0.0
  %474 = vmatpush1.msra.mxu0 %v392
  %475 = vmatprep.subr.mxu0 0.0
  %476 = vmatpush1.msra.mxu0 %v393
  %477 = vmatprep.subr.mxu0 0.0
  %478 = vmatpush1.msra.mxu0 %v394
  %479 = vmatprep.subr.mxu0 0.0
  %480 = vmatpush1.msra.mxu0 %v395
  %481 = vmatprep.subr.mxu0 0.0
  %482 = vmatpush1.msra.mxu0 %v396
  %483 = vmatprep.subr.mxu0 0.0
  %484 = vmatpush1.msra.mxu0 %v397
  %485 = vmatprep.subr.mxu0 0.0
  %486 = vmatpush1.msra.mxu0 %v398
  %487 = vmatprep.subr.mxu0 0.0
  %488 = vmatpush1.msra.mxu0 %v399
  %489 = vmatprep.subr.mxu0 0.0
  %490 = vmatpush1.msra.mxu0 %v400
  %491 = vmatprep.subr.mxu0 0.0
  %492 = vmatpush1.msra.mxu0 %v401
  %493 = vmatprep.subr.mxu0 0.0
  %494 = vmatpush1.msra.mxu0 %v402
  %495 = vmatprep.subr.mxu0 0.0
  %496 = vmatpush1.msra.mxu0 %v403
  %497 = vmatprep.subr.mxu0 0.0
  %498 = vmatpush1.msra.mxu0 %v404
  %499 = vmatprep.subr.mxu0 0.0
  %500 = vmatpush1.msra.mxu0 %v405
  %501 = vmatprep.subr.mxu0 0.0
  %502 = vmatpush1.msra.mxu0 %v406
  %503 = vmatprep.subr.mxu0 0.0
  %504 = vmatpush1.msra.mxu0 %v407
  %505 = vmatprep.subr.mxu0 0.0
  %506 = vmatpush1.msra.mxu0 %v408
  %507 = vmatprep.subr.mxu0 0.0
  %508 = vmatpush1.msra.mxu0 %v409
  %509 = vmatprep.subr.mxu0 0.0
  %510 = vmatpush1.msra.mxu0 %v410
  %511 = vmatprep.subr.mxu0 0.0
  %512 = vmatpush1.msra.mxu0 %v411
  %513 = vmatprep.subr.mxu0 0.0
  %514 = vmatpush1.msra.mxu0 %v412
  %515 = vmatprep.mubr.f32.mxu0 %v448
  %516 = vmatmul.mubr.f32.gmra.mrb[0].mxu0 %v447
  %v517 = vpop.f32.mrb[0].mxu0
  %v518 = vadd.f32 0.0, %v517
  %v519 = vpop.f32.mrb[0].mxu0
  %520 = vdwg.mxu0
  %521 = vmatprep.subr.mxu0 0.0
  %522 = vmatpush1.msra.mxu0 %v413
  %523 = vmatprep.subr.mxu0 0.0
  %524 = vmatpush1.msra.mxu0 %v414
  %525 = vmatprep.subr.mxu0 0.0
  %526 = vmatpush1.msra.mxu0 %v415
  %527 = vmatprep.subr.mxu0 0.0
  %528 = vmatpush1.msra.mxu0 %v416
  %529 = vmatprep.subr.mxu0 0.0
  %530 = vmatpush1.msra.mxu0 %v417
  %531 = vmatprep.subr.mxu0 0.0
  %532 = vmatpush1.msra.mxu0 %v418
  %533 = vmatprep.subr.mxu0 0.0
  %534 = vmatpush1.msra.mxu0 %v419
  %535 = vmatprep.subr.mxu0 0.0
  %536 = vmatpush1.msra.mxu0 %v420
  %537 = vmatprep.subr.mxu0 0.0
  %538 = vmatpush1.msra.mxu0 %v421
  %539 = vmatprep.subr.mxu0 0.0
  %540 = vmatpush1.msra.mxu0 %v422
  %541 = vmatprep.subr.mxu0 0.0
  %542 = vmatpush1.msra.mxu0 %v423
  %543 = vmatprep.subr.mxu0 0.0
  %544 = vmatpush1.msra.mxu0 %v424
  %545 = vmatprep.subr.mxu0 0.0
  %546 = vmatpush1.msra.mxu0 %v425
  %547 = vmatprep.subr.mxu0 0.0
  %548 = vmatpush1.msra.mxu0 %v426
  %549 = vmatprep.subr.mxu0 0.0
  %550 = vmatpush1.msra.mxu0 %v427
  %551 = vmatprep.subr.mxu0 0.0
  %552 = vmatpush1.msra.mxu0 %v428
  %553 = vmatprep.subr.mxu0 0.0
  %554 = vmatpush1.msra.mxu0 0.0
  %555 = vmatprep.subr.mxu0 0.0
  %556 = vmatpush1.msra.mxu0 0.0
  %557 = vmatprep.subr.mxu0 0.0
  %558 = vmatpush1.msra.mxu0 0.0
  %559 = vmatprep.subr.mxu0 0.0
  %560 = vmatpush1.msra.mxu0 0.0
  %561 = vmatprep.subr.mxu0 0.0
  %562 = vmatpush1.msra.mxu0 0.0
  %563 = vmatprep.subr.mxu0 0.0
  %564 = vmatpush1.msra.mxu0 0.0
  %565 = vmatprep.subr.mxu0 0.0
  %566 = vmatpush1.msra.mxu0 0.0
  %567 = vmatprep.subr.mxu0 0.0
  %568 = vmatpush1.msra.mxu0 0.0
  %569 = vmatprep.subr.mxu0 0.0
  %570 = vmatpush1.msra.mxu0 0.0
  %571 = vmatprep.subr.mxu0 0.0
  %572 = vmatpush1.msra.mxu0 0.0
  %573 = vmatprep.subr.mxu0 0.0
  %574 = vmatpush1.msra.mxu0 0.0
  %575 = vmatprep.subr.mxu0 0.0
  %576 = vmatpush1.msra.mxu0 0.0
  %577 = vmatprep.subr.mxu0 0.0
  %578 = vmatpush1.msra.mxu0 0.0
  %579 = vmatprep.subr.mxu0 0.0
  %580 = vmatpush1.msra.mxu0 0.0
  %581 = vmatprep.subr.mxu0 0.0
  %582 = vmatpush1.msra.mxu0 0.0
  %583 = vmatprep.subr.mxu0 0.0
  %584 = vmatpush1.msra.mxu0 0.0
  %585 = vmatprep.mubr.f32.mxu0 0.0
  %586 = vmatmul.mubr.f32.gmra.mrb[0].mxu0 %v449
  %v587 = vpop.f32.mrb[0].mxu0
  %v588 = vadd.f32 %v518, %v587
  %v589 = vpop.f32.mrb[0].mxu0
  %590 = vdwg.mxu0
  %v591 = vadd.f32 %v450, %v588
  %vm592 = vcmask 59392
  %593 = vst.msk [vmem:[%s2] sm:$0x7] %vm592, %v591
  // Predicated region
  $region14: #{tpu_custom_call.1} parent=0 // pred_check
    _
  $region15: #{tpu_custom_call.1} parent=0 // pred_check_branch
    %595 = sbr.rel (0) target = $region17
  $region16: #{tpu_custom_call.1} parent=0 // pred_region
    _
  $region17: #{tpu_custom_call.1} parent=0 // pred_fallthru
    _
  // Predicated region
  $region18: #{tpu_custom_call.1} parent=0 // pred_check
    _
  $region19: #{tpu_custom_call.1} parent=0 // pred_check_branch
    %597 = sbr.rel (0) target = $region21
  $region20: #{tpu_custom_call.1} parent=0 // pred_region
    _
  $region21: #{tpu_custom_call.1} parent=0 // pred_fallthru
    _

</llo_original>
